<compile_context>
chip_gen: v6e
topology: v6e:2x2x1
jax: 0.10.0
libtpu: 0.0.40
codegen_flags: <defaults>
</compile_context>

<pallas_src>
import jax
import jax.numpy as jnp
from jax.experimental import pallas as pl
from jax.experimental.pallas import tpu as pltpu

LIBRARY_DIM = 7   # terms: [1, o, o^2, o*c, o*t, o^2*c, o^2*t]
N_STATE = 3       # coefficients have 3 output columns
LANES = 128       # TPU lane width
TILE_ROWS = 512   # rows of 128 lanes per grid step (512*128 = 65536 batch elems)


# ----------------------------------------------------------------------------
# Fused kernel: masked-coefficient broadcast-FMA accumulation + L1 scalar
# ----------------------------------------------------------------------------
def _sindy_kernel(coef_ref, mask_ref, z_ref, zdot_ref, l1_ref):
    # z_ref: (3, TR, 128) lane-dense slabs; rows = [treatment, covariate, outcome]
    t = z_ref[0]           # (TR, 128)
    c = z_ref[1]
    o = z_ref[2]

    o2 = o * o
    oc = o * c
    ot = o * t
    o2c = o2 * c
    o2t = o2 * t

    # zdot[:, j] = m0j + m1j*o + m2j*o^2 + m3j*o*c + m4j*o*t + m5j*o^2*c + m6j*o^2*t
    for j in range(N_STATE):
        m = [coef_ref[i, j] * mask_ref[i, j] for i in range(LIBRARY_DIM)]
        zdot_ref[j] = (m[0]
                       + m[1] * o
                       + m[2] * o2
                       + m[3] * oc
                       + m[4] * ot
                       + m[5] * o2c
                       + m[6] * o2t)

    # L1 = mean(|coef * mask|) over the 21 scalars.  Every grid step writes its
    # OWN output block with the identical value -> safe under "parallel".
    acc = None
    for i in range(LIBRARY_DIM):
        for j in range(N_STATE):
            v = jnp.abs(coef_ref[i, j] * mask_ref[i, j])
            acc = v if acc is None else acc + v
    l1_val = acc * (1.0 / float(LIBRARY_DIM * N_STATE))
    l1_ref[...] = jnp.broadcast_to(l1_val, l1_ref.shape)


# ----------------------------------------------------------------------------
# Wrapper: layout transform (B -> lanes), padding, grid, and the pallas_call
# ----------------------------------------------------------------------------
def sindy_forward(z, coefficients, coefficient_mask, *, tile_rows=TILE_ROWS):
    """z: (B, 3); coefficients, coefficient_mask: (7, 3).

    Returns (z_dot_pred (B, 3) float32, l1_reg_loss scalar float32).
    """
    B = z.shape[0]
    assert z.shape[1] == N_STATE
    z = z.astype(jnp.float32)
    coefficients = coefficients.astype(jnp.float32)
    coefficient_mask = coefficient_mask.astype(jnp.float32)

    # Lane-dense layout: (B,3) -> (3,B) -> pad -> (3, rows, 128).
    n_rows = pl.cdiv(max(B, 1), LANES)
    if n_rows <= tile_rows:
        tr = n_rows                              # single block covers everything
        n_rows_p = n_rows
    else:
        tr = max(8, (tile_rows // 8) * 8)        # sublane-aligned tile
        n_rows_p = pl.cdiv(n_rows, tr) * tr
    Bp = n_rows_p * LANES
    grid = (n_rows_p // tr,)

    zt = jnp.transpose(z)                        # (3, B)
    if Bp != B:
        zt = jnp.pad(zt, ((0, 0), (0, Bp - B)))
    z3 = zt.reshape(N_STATE, n_rows_p, LANES)

    zdot3, l1_blk = pl.pallas_call(
        _sindy_kernel,
        out_shape=(
            jax.ShapeDtypeStruct((N_STATE, n_rows_p, LANES), jnp.float32),
            jax.ShapeDtypeStruct((grid[0], 1, LANES), jnp.float32),
        ),
        grid=grid,
        in_specs=[
            pl.BlockSpec(memory_space=pltpu.MemorySpace.SMEM),   # coefficients (7,3)
            pl.BlockSpec(memory_space=pltpu.MemorySpace.SMEM),   # mask (7,3)
            pl.BlockSpec((N_STATE, tr, LANES), lambda i: (0, i, 0)),
        ],
        out_specs=(
            pl.BlockSpec((N_STATE, tr, LANES), lambda i: (0, i, 0)),
            pl.BlockSpec((1, 1, LANES), lambda i: (i, 0, 0)),
        ),
        compiler_params=pltpu.CompilerParams(
            dimension_semantics=("parallel",),
            vmem_limit_bytes=32 * 1024 * 1024,
        ),
    )(coefficients, coefficient_mask, z3)

    z_dot_pred = zdot3.reshape(N_STATE, Bp)[:, :B].T   # back to (B, 3)
    l1_reg_loss = l1_blk[0, 0, 0]
    return z_dot_pred, l1_reg_loss


# ----------------------------------------------------------------------------
# Pure-JAX reference (mirrors the PyTorch forward) for correctness checking
# ----------------------------------------------------------------------------
def sindy_reference(z, coefficients, coefficient_mask):
    treatment = z[:, 0:1]
    covariate = z[:, 1:2]
    outcome = z[:, 2:3]
    theta = jnp.concatenate(
        [jnp.ones_like(outcome), outcome, outcome ** 2, outcome * covariate,
         outcome * treatment, outcome ** 2 * covariate, outcome ** 2 * treatment],
        axis=1)
    masked = coefficients * coefficient_mask
    return theta @ masked, jnp.mean(jnp.abs(masked))


# TODO(synk): update_mask (in-place buffer thresholding) and get_dynamics
# (string/dict formatting) are host-side utilities, not part of the forward
# pass, and are intentionally not expressed as kernels.

if __name__ == "__main__":
    key = jax.random.PRNGKey(0)
    k_z, k_c, k_z2 = jax.random.split(key, 3)

    coefficients = jax.random.normal(k_c, (LIBRARY_DIM, N_STATE), jnp.float32)
    coefficient_mask = jnp.ones((LIBRARY_DIM, N_STATE), jnp.float32)

    # Small-batch case (module-typical shape), single grid step.
    B = 8
    z = jax.random.normal(k_z, (B, N_STATE), jnp.float32)
    z_dot_pred, l1_reg_loss = sindy_forward(z, coefficients, coefficient_mask)
    jax.block_until_ready((z_dot_pred, l1_reg_loss))
    ref_zdot, ref_l1 = sindy_reference(z, coefficients, coefficient_mask)
    assert z_dot_pred.shape == (B, N_STATE)
    assert bool(jnp.all(jnp.isfinite(z_dot_pred))) and bool(jnp.isfinite(l1_reg_loss))
    assert bool(jnp.allclose(z_dot_pred, ref_zdot, atol=1e-5, rtol=1e-5))
    assert bool(jnp.allclose(l1_reg_loss, ref_l1, atol=1e-6, rtol=1e-6))

    # Larger case exercising the batch grid, tail padding and per-step L1 blocks.
    B2 = 2000
    z2 = jax.random.normal(k_z2, (B2, N_STATE), jnp.float32)
    z_dot2, l1_2 = sindy_forward(z2, coefficients, coefficient_mask, tile_rows=8)
    jax.block_until_ready((z_dot2, l1_2))
    ref_zdot2, ref_l1_2 = sindy_reference(z2, coefficients, coefficient_mask)
    assert z_dot2.shape == (B2, N_STATE)
    assert bool(jnp.allclose(z_dot2, ref_zdot2, atol=1e-5, rtol=1e-5))
    assert bool(jnp.allclose(l1_2, ref_l1_2, atol=1e-6, rtol=1e-6))

    print("KERNEL_OK")
</pallas_src>

<mosaic_0001>
module attributes {stable_mosaic.version = 11 : i64} {
  func.func @_sindy_kernel(%arg0: i32, %arg1: memref<7x3xf32, #tpu.memory_space<smem>>, %arg2: memref<7x3xf32, #tpu.memory_space<smem>>, %arg3: memref<3x1x128xf32, #tpu.memory_space<vmem>>, %arg4: memref<3x1x128xf32, #tpu.memory_space<vmem>>, %arg5: memref<1x1x128xf32, #tpu.memory_space<vmem>>) attributes {dimension_semantics = [#tpu.dimension_semantics<parallel>], iteration_bounds = array<i64: 1>, scalar_prefetch = 0 : i64, scratch_operands = 0 : i64, tpu.core_type = #tpu.core_type<tc>, window_params = [{transform_indices = @transform_0, window_bounds = array<i64: 7, 3>}, {transform_indices = @transform_1, window_bounds = array<i64: 7, 3>}, {transform_indices = @transform_2, window_bounds = array<i64: 3, 1, 128>}, {transform_indices = @transform_3, window_bounds = array<i64: 3, 1, 128>}, {transform_indices = @transform_4, window_bounds = array<i64: 1, 1, 128>}]} {
    %c0 = arith.constant 0 : index
    %c0_0 = arith.constant 0 : index
    %c0_1 = arith.constant 0 : index
    %0 = vector.load %arg3[%c0, %c0_0, %c0_1] : memref<3x1x128xf32, #tpu.memory_space<vmem>>, vector<1x1x128xf32>
    %1 = vector.shape_cast %0 : vector<1x1x128xf32> to vector<1x128xf32>
    %c1 = arith.constant 1 : index
    %c0_2 = arith.constant 0 : index
    %c0_3 = arith.constant 0 : index
    %2 = vector.load %arg3[%c1, %c0_2, %c0_3] : memref<3x1x128xf32, #tpu.memory_space<vmem>>, vector<1x1x128xf32>
    %3 = vector.shape_cast %2 : vector<1x1x128xf32> to vector<1x128xf32>
    %c2 = arith.constant 2 : index
    %c0_4 = arith.constant 0 : index
    %c0_5 = arith.constant 0 : index
    %4 = vector.load %arg3[%c2, %c0_4, %c0_5] : memref<3x1x128xf32, #tpu.memory_space<vmem>>, vector<1x1x128xf32>
    %5 = vector.shape_cast %4 : vector<1x1x128xf32> to vector<1x128xf32>
    %6 = arith.mulf %5, %5 : vector<1x128xf32>
    %7 = arith.mulf %5, %3 : vector<1x128xf32>
    %8 = arith.mulf %5, %1 : vector<1x128xf32>
    %9 = arith.mulf %6, %3 : vector<1x128xf32>
    %10 = arith.mulf %6, %1 : vector<1x128xf32>
    %c0_6 = arith.constant 0 : index
    %c0_7 = arith.constant 0 : index
    %11 = memref.load %arg1[%c0_6, %c0_7] : memref<7x3xf32, #tpu.memory_space<smem>>
    %c0_8 = arith.constant 0 : index
    %c0_9 = arith.constant 0 : index
    %12 = memref.load %arg2[%c0_8, %c0_9] : memref<7x3xf32, #tpu.memory_space<smem>>
    %13 = arith.mulf %11, %12 : f32
    %c1_10 = arith.constant 1 : index
    %c0_11 = arith.constant 0 : index
    %14 = memref.load %arg1[%c1_10, %c0_11] : memref<7x3xf32, #tpu.memory_space<smem>>
    %c1_12 = arith.constant 1 : index
    %c0_13 = arith.constant 0 : index
    %15 = memref.load %arg2[%c1_12, %c0_13] : memref<7x3xf32, #tpu.memory_space<smem>>
    %16 = arith.mulf %14, %15 : f32
    %c2_14 = arith.constant 2 : index
    %c0_15 = arith.constant 0 : index
    %17 = memref.load %arg1[%c2_14, %c0_15] : memref<7x3xf32, #tpu.memory_space<smem>>
    %c2_16 = arith.constant 2 : index
    %c0_17 = arith.constant 0 : index
    %18 = memref.load %arg2[%c2_16, %c0_17] : memref<7x3xf32, #tpu.memory_space<smem>>
    %19 = arith.mulf %17, %18 : f32
    %c3 = arith.constant 3 : index
    %c0_18 = arith.constant 0 : index
    %20 = memref.load %arg1[%c3, %c0_18] : memref<7x3xf32, #tpu.memory_space<smem>>
    %c3_19 = arith.constant 3 : index
    %c0_20 = arith.constant 0 : index
    %21 = memref.load %arg2[%c3_19, %c0_20] : memref<7x3xf32, #tpu.memory_space<smem>>
    %22 = arith.mulf %20, %21 : f32
    %c4 = arith.constant 4 : index
    %c0_21 = arith.constant 0 : index
    %23 = memref.load %arg1[%c4, %c0_21] : memref<7x3xf32, #tpu.memory_space<smem>>
    %c4_22 = arith.constant 4 : index
    %c0_23 = arith.constant 0 : index
    %24 = memref.load %arg2[%c4_22, %c0_23] : memref<7x3xf32, #tpu.memory_space<smem>>
    %25 = arith.mulf %23, %24 : f32
    %c5 = arith.constant 5 : index
    %c0_24 = arith.constant 0 : index
    %26 = memref.load %arg1[%c5, %c0_24] : memref<7x3xf32, #tpu.memory_space<smem>>
    %c5_25 = arith.constant 5 : index
    %c0_26 = arith.constant 0 : index
    %27 = memref.load %arg2[%c5_25, %c0_26] : memref<7x3xf32, #tpu.memory_space<smem>>
    %28 = arith.mulf %26, %27 : f32
    %c6 = arith.constant 6 : index
    %c0_27 = arith.constant 0 : index
    %29 = memref.load %arg1[%c6, %c0_27] : memref<7x3xf32, #tpu.memory_space<smem>>
    %c6_28 = arith.constant 6 : index
    %c0_29 = arith.constant 0 : index
    %30 = memref.load %arg2[%c6_28, %c0_29] : memref<7x3xf32, #tpu.memory_space<smem>>
    %31 = arith.mulf %29, %30 : f32
    %32 = vector.broadcast %16 : f32 to vector<1x128xf32>
    %33 = arith.mulf %32, %5 : vector<1x128xf32>
    %34 = vector.broadcast %13 : f32 to vector<1x128xf32>
    %35 = arith.addf %34, %33 : vector<1x128xf32>
    %36 = vector.broadcast %19 : f32 to vector<1x128xf32>
    %37 = arith.mulf %36, %6 : vector<1x128xf32>
    %38 = arith.addf %35, %37 : vector<1x128xf32>
    %39 = vector.broadcast %22 : f32 to vector<1x128xf32>
    %40 = arith.mulf %39, %7 : vector<1x128xf32>
    %41 = arith.addf %38, %40 : vector<1x128xf32>
    %42 = vector.broadcast %25 : f32 to vector<1x128xf32>
    %43 = arith.mulf %42, %8 : vector<1x128xf32>
    %44 = arith.addf %41, %43 : vector<1x128xf32>
    %45 = vector.broadcast %28 : f32 to vector<1x128xf32>
    %46 = arith.mulf %45, %9 : vector<1x128xf32>
    %47 = arith.addf %44, %46 : vector<1x128xf32>
    %48 = vector.broadcast %31 : f32 to vector<1x128xf32>
    %49 = arith.mulf %48, %10 : vector<1x128xf32>
    %50 = arith.addf %47, %49 : vector<1x128xf32>
    %c0_30 = arith.constant 0 : index
    %c0_31 = arith.constant 0 : index
    %c0_32 = arith.constant 0 : index
    %51 = vector.load %arg4[%c0_30, %c0_31, %c0_32] : memref<3x1x128xf32, #tpu.memory_space<vmem>>, vector<1x1x128xf32>
    %52 = vector.shape_cast %51 : vector<1x1x128xf32> to vector<1x128xf32>
    %53 = vector.shape_cast %50 : vector<1x128xf32> to vector<1x1x128xf32>
    tpu.vector_store %arg4[%c0_30, %c0_31, %c0_32], %53 {strides = array<i32>} : memref<3x1x128xf32, #tpu.memory_space<vmem>>, vector<1x1x128xf32>,
    %c0_33 = arith.constant 0 : index
    %c1_34 = arith.constant 1 : index
    %54 = memref.load %arg1[%c0_33, %c1_34] : memref<7x3xf32, #tpu.memory_space<smem>>
    %c0_35 = arith.constant 0 : index
    %c1_36 = arith.constant 1 : index
    %55 = memref.load %arg2[%c0_35, %c1_36] : memref<7x3xf32, #tpu.memory_space<smem>>
    %56 = arith.mulf %54, %55 : f32
    %c1_37 = arith.constant 1 : index
    %c1_38 = arith.constant 1 : index
    %57 = memref.load %arg1[%c1_37, %c1_38] : memref<7x3xf32, #tpu.memory_space<smem>>
    %c1_39 = arith.constant 1 : index
    %c1_40 = arith.constant 1 : index
    %58 = memref.load %arg2[%c1_39, %c1_40] : memref<7x3xf32, #tpu.memory_space<smem>>
    %59 = arith.mulf %57, %58 : f32
    %c2_41 = arith.constant 2 : index
    %c1_42 = arith.constant 1 : index
    %60 = memref.load %arg1[%c2_41, %c1_42] : memref<7x3xf32, #tpu.memory_space<smem>>
    %c2_43 = arith.constant 2 : index
    %c1_44 = arith.constant 1 : index
    %61 = memref.load %arg2[%c2_43, %c1_44] : memref<7x3xf32, #tpu.memory_space<smem>>
    %62 = arith.mulf %60, %61 : f32
    %c3_45 = arith.constant 3 : index
    %c1_46 = arith.constant 1 : index
    %63 = memref.load %arg1[%c3_45, %c1_46] : memref<7x3xf32, #tpu.memory_space<smem>>
    %c3_47 = arith.constant 3 : index
    %c1_48 = arith.constant 1 : index
    %64 = memref.load %arg2[%c3_47, %c1_48] : memref<7x3xf32, #tpu.memory_space<smem>>
    %65 = arith.mulf %63, %64 : f32
    %c4_49 = arith.constant 4 : index
    %c1_50 = arith.constant 1 : index
    %66 = memref.load %arg1[%c4_49, %c1_50] : memref<7x3xf32, #tpu.memory_space<smem>>
    %c4_51 = arith.constant 4 : index
    %c1_52 = arith.constant 1 : index
    %67 = memref.load %arg2[%c4_51, %c1_52] : memref<7x3xf32, #tpu.memory_space<smem>>
    %68 = arith.mulf %66, %67 : f32
    %c5_53 = arith.constant 5 : index
    %c1_54 = arith.constant 1 : index
    %69 = memref.load %arg1[%c5_53, %c1_54] : memref<7x3xf32, #tpu.memory_space<smem>>
    %c5_55 = arith.constant 5 : index
    %c1_56 = arith.constant 1 : index
    %70 = memref.load %arg2[%c5_55, %c1_56] : memref<7x3xf32, #tpu.memory_space<smem>>
    %71 = arith.mulf %69, %70 : f32
    %c6_57 = arith.constant 6 : index
    %c1_58 = arith.constant 1 : index
    %72 = memref.load %arg1[%c6_57, %c1_58] : memref<7x3xf32, #tpu.memory_space<smem>>
    %c6_59 = arith.constant 6 : index
    %c1_60 = arith.constant 1 : index
    %73 = memref.load %arg2[%c6_59, %c1_60] : memref<7x3xf32, #tpu.memory_space<smem>>
    %74 = arith.mulf %72, %73 : f32
    %75 = vector.broadcast %59 : f32 to vector<1x128xf32>
    %76 = arith.mulf %75, %5 : vector<1x128xf32>
    %77 = vector.broadcast %56 : f32 to vector<1x128xf32>
    %78 = arith.addf %77, %76 : vector<1x128xf32>
    %79 = vector.broadcast %62 : f32 to vector<1x128xf32>
    %80 = arith.mulf %79, %6 : vector<1x128xf32>
    %81 = arith.addf %78, %80 : vector<1x128xf32>
    %82 = vector.broadcast %65 : f32 to vector<1x128xf32>
    %83 = arith.mulf %82, %7 : vector<1x128xf32>
    %84 = arith.addf %81, %83 : vector<1x128xf32>
    %85 = vector.broadcast %68 : f32 to vector<1x128xf32>
    %86 = arith.mulf %85, %8 : vector<1x128xf32>
    %87 = arith.addf %84, %86 : vector<1x128xf32>
    %88 = vector.broadcast %71 : f32 to vector<1x128xf32>
    %89 = arith.mulf %88, %9 : vector<1x128xf32>
    %90 = arith.addf %87, %89 : vector<1x128xf32>
    %91 = vector.broadcast %74 : f32 to vector<1x128xf32>
    %92 = arith.mulf %91, %10 : vector<1x128xf32>
    %93 = arith.addf %90, %92 : vector<1x128xf32>
    %c1_61 = arith.constant 1 : index
    %c0_62 = arith.constant 0 : index
    %c0_63 = arith.constant 0 : index
    %94 = vector.load %arg4[%c1_61, %c0_62, %c0_63] : memref<3x1x128xf32, #tpu.memory_space<vmem>>, vector<1x1x128xf32>
    %95 = vector.shape_cast %94 : vector<1x1x128xf32> to vector<1x128xf32>
    %96 = vector.shape_cast %93 : vector<1x128xf32> to vector<1x1x128xf32>
    tpu.vector_store %arg4[%c1_61, %c0_62, %c0_63], %96 {strides = array<i32>} : memref<3x1x128xf32, #tpu.memory_space<vmem>>, vector<1x1x128xf32>,
    %c0_64 = arith.constant 0 : index
    %c2_65 = arith.constant 2 : index
    %97 = memref.load %arg1[%c0_64, %c2_65] : memref<7x3xf32, #tpu.memory_space<smem>>
    %c0_66 = arith.constant 0 : index
    %c2_67 = arith.constant 2 : index
    %98 = memref.load %arg2[%c0_66, %c2_67] : memref<7x3xf32, #tpu.memory_space<smem>>
    %99 = arith.mulf %97, %98 : f32
    %c1_68 = arith.constant 1 : index
    %c2_69 = arith.constant 2 : index
    %100 = memref.load %arg1[%c1_68, %c2_69] : memref<7x3xf32, #tpu.memory_space<smem>>
    %c1_70 = arith.constant 1 : index
    %c2_71 = arith.constant 2 : index
    %101 = memref.load %arg2[%c1_70, %c2_71] : memref<7x3xf32, #tpu.memory_space<smem>>
    %102 = arith.mulf %100, %101 : f32
    %c2_72 = arith.constant 2 : index
    %c2_73 = arith.constant 2 : index
    %103 = memref.load %arg1[%c2_72, %c2_73] : memref<7x3xf32, #tpu.memory_space<smem>>
    %c2_74 = arith.constant 2 : index
    %c2_75 = arith.constant 2 : index
    %104 = memref.load %arg2[%c2_74, %c2_75] : memref<7x3xf32, #tpu.memory_space<smem>>
    %105 = arith.mulf %103, %104 : f32
    %c3_76 = arith.constant 3 : index
    %c2_77 = arith.constant 2 : index
    %106 = memref.load %arg1[%c3_76, %c2_77] : memref<7x3xf32, #tpu.memory_space<smem>>
    %c3_78 = arith.constant 3 : index
    %c2_79 = arith.constant 2 : index
    %107 = memref.load %arg2[%c3_78, %c2_79] : memref<7x3xf32, #tpu.memory_space<smem>>
    %108 = arith.mulf %106, %107 : f32
    %c4_80 = arith.constant 4 : index
    %c2_81 = arith.constant 2 : index
    %109 = memref.load %arg1[%c4_80, %c2_81] : memref<7x3xf32, #tpu.memory_space<smem>>
    %c4_82 = arith.constant 4 : index
    %c2_83 = arith.constant 2 : index
    %110 = memref.load %arg2[%c4_82, %c2_83] : memref<7x3xf32, #tpu.memory_space<smem>>
    %111 = arith.mulf %109, %110 : f32
    %c5_84 = arith.constant 5 : index
    %c2_85 = arith.constant 2 : index
    %112 = memref.load %arg1[%c5_84, %c2_85] : memref<7x3xf32, #tpu.memory_space<smem>>
    %c5_86 = arith.constant 5 : index
    %c2_87 = arith.constant 2 : index
    %113 = memref.load %arg2[%c5_86, %c2_87] : memref<7x3xf32, #tpu.memory_space<smem>>
    %114 = arith.mulf %112, %113 : f32
    %c6_88 = arith.constant 6 : index
    %c2_89 = arith.constant 2 : index
    %115 = memref.load %arg1[%c6_88, %c2_89] : memref<7x3xf32, #tpu.memory_space<smem>>
    %c6_90 = arith.constant 6 : index
    %c2_91 = arith.constant 2 : index
    %116 = memref.load %arg2[%c6_90, %c2_91] : memref<7x3xf32, #tpu.memory_space<smem>>
    %117 = arith.mulf %115, %116 : f32
    %118 = vector.broadcast %102 : f32 to vector<1x128xf32>
    %119 = arith.mulf %118, %5 : vector<1x128xf32>
    %120 = vector.broadcast %99 : f32 to vector<1x128xf32>
    %121 = arith.addf %120, %119 : vector<1x128xf32>
    %122 = vector.broadcast %105 : f32 to vector<1x128xf32>
    %123 = arith.mulf %122, %6 : vector<1x128xf32>
    %124 = arith.addf %121, %123 : vector<1x128xf32>
    %125 = vector.broadcast %108 : f32 to vector<1x128xf32>
    %126 = arith.mulf %125, %7 : vector<1x128xf32>
    %127 = arith.addf %124, %126 : vector<1x128xf32>
    %128 = vector.broadcast %111 : f32 to vector<1x128xf32>
    %129 = arith.mulf %128, %8 : vector<1x128xf32>
    %130 = arith.addf %127, %129 : vector<1x128xf32>
    %131 = vector.broadcast %114 : f32 to vector<1x128xf32>
    %132 = arith.mulf %131, %9 : vector<1x128xf32>
    %133 = arith.addf %130, %132 : vector<1x128xf32>
    %134 = vector.broadcast %117 : f32 to vector<1x128xf32>
    %135 = arith.mulf %134, %10 : vector<1x128xf32>
    %136 = arith.addf %133, %135 : vector<1x128xf32>
    %c2_92 = arith.constant 2 : index
    %c0_93 = arith.constant 0 : index
    %c0_94 = arith.constant 0 : index
    %137 = vector.load %arg4[%c2_92, %c0_93, %c0_94] : memref<3x1x128xf32, #tpu.memory_space<vmem>>, vector<1x1x128xf32>
    %138 = vector.shape_cast %137 : vector<1x1x128xf32> to vector<1x128xf32>
    %139 = vector.shape_cast %136 : vector<1x128xf32> to vector<1x1x128xf32>
    tpu.vector_store %arg4[%c2_92, %c0_93, %c0_94], %139 {strides = array<i32>} : memref<3x1x128xf32, #tpu.memory_space<vmem>>, vector<1x1x128xf32>,
    %c0_95 = arith.constant 0 : index
    %c0_96 = arith.constant 0 : index
    %140 = memref.load %arg1[%c0_95, %c0_96] : memref<7x3xf32, #tpu.memory_space<smem>>
    %c0_97 = arith.constant 0 : index
    %c0_98 = arith.constant 0 : index
    %141 = memref.load %arg2[%c0_97, %c0_98] : memref<7x3xf32, #tpu.memory_space<smem>>
    %142 = arith.mulf %140, %141 : f32
    %143 = math.absf %142 : f32
    %c0_99 = arith.constant 0 : index
    %c1_100 = arith.constant 1 : index
    %144 = memref.load %arg1[%c0_99, %c1_100] : memref<7x3xf32, #tpu.memory_space<smem>>
    %c0_101 = arith.constant 0 : index
    %c1_102 = arith.constant 1 : index
    %145 = memref.load %arg2[%c0_101, %c1_102] : memref<7x3xf32, #tpu.memory_space<smem>>
    %146 = arith.mulf %144, %145 : f32
    %147 = math.absf %146 : f32
    %148 = arith.addf %143, %147 : f32
    %c0_103 = arith.constant 0 : index
    %c2_104 = arith.constant 2 : index
    %149 = memref.load %arg1[%c0_103, %c2_104] : memref<7x3xf32, #tpu.memory_space<smem>>
    %c0_105 = arith.constant 0 : index
    %c2_106 = arith.constant 2 : index
    %150 = memref.load %arg2[%c0_105, %c2_106] : memref<7x3xf32, #tpu.memory_space<smem>>
    %151 = arith.mulf %149, %150 : f32
    %152 = math.absf %151 : f32
    %153 = arith.addf %148, %152 : f32
    %c1_107 = arith.constant 1 : index
    %c0_108 = arith.constant 0 : index
    %154 = memref.load %arg1[%c1_107, %c0_108] : memref<7x3xf32, #tpu.memory_space<smem>>
    %c1_109 = arith.constant 1 : index
    %c0_110 = arith.constant 0 : index
    %155 = memref.load %arg2[%c1_109, %c0_110] : memref<7x3xf32, #tpu.memory_space<smem>>
    %156 = arith.mulf %154, %155 : f32
    %157 = math.absf %156 : f32
    %158 = arith.addf %153, %157 : f32
    %c1_111 = arith.constant 1 : index
    %c1_112 = arith.constant 1 : index
    %159 = memref.load %arg1[%c1_111, %c1_112] : memref<7x3xf32, #tpu.memory_space<smem>>
    %c1_113 = arith.constant 1 : index
    %c1_114 = arith.constant 1 : index
    %160 = memref.load %arg2[%c1_113, %c1_114] : memref<7x3xf32, #tpu.memory_space<smem>>
    %161 = arith.mulf %159, %160 : f32
    %162 = math.absf %161 : f32
    %163 = arith.addf %158, %162 : f32
    %c1_115 = arith.constant 1 : index
    %c2_116 = arith.constant 2 : index
    %164 = memref.load %arg1[%c1_115, %c2_116] : memref<7x3xf32, #tpu.memory_space<smem>>
    %c1_117 = arith.constant 1 : index
    %c2_118 = arith.constant 2 : index
    %165 = memref.load %arg2[%c1_117, %c2_118] : memref<7x3xf32, #tpu.memory_space<smem>>
    %166 = arith.mulf %164, %165 : f32
    %167 = math.absf %166 : f32
    %168 = arith.addf %163, %167 : f32
    %c2_119 = arith.constant 2 : index
    %c0_120 = arith.constant 0 : index
    %169 = memref.load %arg1[%c2_119, %c0_120] : memref<7x3xf32, #tpu.memory_space<smem>>
    %c2_121 = arith.constant 2 : index
    %c0_122 = arith.constant 0 : index
    %170 = memref.load %arg2[%c2_121, %c0_122] : memref<7x3xf32, #tpu.memory_space<smem>>
    %171 = arith.mulf %169, %170 : f32
    %172 = math.absf %171 : f32
    %173 = arith.addf %168, %172 : f32
    %c2_123 = arith.constant 2 : index
    %c1_124 = arith.constant 1 : index
    %174 = memref.load %arg1[%c2_123, %c1_124] : memref<7x3xf32, #tpu.memory_space<smem>>
    %c2_125 = arith.constant 2 : index
    %c1_126 = arith.constant 1 : index
    %175 = memref.load %arg2[%c2_125, %c1_126] : memref<7x3xf32, #tpu.memory_space<smem>>
    %176 = arith.mulf %174, %175 : f32
    %177 = math.absf %176 : f32
    %178 = arith.addf %173, %177 : f32
    %c2_127 = arith.constant 2 : index
    %c2_128 = arith.constant 2 : index
    %179 = memref.load %arg1[%c2_127, %c2_128] : memref<7x3xf32, #tpu.memory_space<smem>>
    %c2_129 = arith.constant 2 : index
    %c2_130 = arith.constant 2 : index
    %180 = memref.load %arg2[%c2_129, %c2_130] : memref<7x3xf32, #tpu.memory_space<smem>>
    %181 = arith.mulf %179, %180 : f32
    %182 = math.absf %181 : f32
    %183 = arith.addf %178, %182 : f32
    %c3_131 = arith.constant 3 : index
    %c0_132 = arith.constant 0 : index
    %184 = memref.load %arg1[%c3_131, %c0_132] : memref<7x3xf32, #tpu.memory_space<smem>>
    %c3_133 = arith.constant 3 : index
    %c0_134 = arith.constant 0 : index
    %185 = memref.load %arg2[%c3_133, %c0_134] : memref<7x3xf32, #tpu.memory_space<smem>>
    %186 = arith.mulf %184, %185 : f32
    %187 = math.absf %186 : f32
    %188 = arith.addf %183, %187 : f32
    %c3_135 = arith.constant 3 : index
    %c1_136 = arith.constant 1 : index
    %189 = memref.load %arg1[%c3_135, %c1_136] : memref<7x3xf32, #tpu.memory_space<smem>>
    %c3_137 = arith.constant 3 : index
    %c1_138 = arith.constant 1 : index
    %190 = memref.load %arg2[%c3_137, %c1_138] : memref<7x3xf32, #tpu.memory_space<smem>>
    %191 = arith.mulf %189, %190 : f32
    %192 = math.absf %191 : f32
    %193 = arith.addf %188, %192 : f32
    %c3_139 = arith.constant 3 : index
    %c2_140 = arith.constant 2 : index
    %194 = memref.load %arg1[%c3_139, %c2_140] : memref<7x3xf32, #tpu.memory_space<smem>>
    %c3_141 = arith.constant 3 : index
    %c2_142 = arith.constant 2 : index
    %195 = memref.load %arg2[%c3_141, %c2_142] : memref<7x3xf32, #tpu.memory_space<smem>>
    %196 = arith.mulf %194, %195 : f32
    %197 = math.absf %196 : f32
    %198 = arith.addf %193, %197 : f32
    %c4_143 = arith.constant 4 : index
    %c0_144 = arith.constant 0 : index
    %199 = memref.load %arg1[%c4_143, %c0_144] : memref<7x3xf32, #tpu.memory_space<smem>>
    %c4_145 = arith.constant 4 : index
    %c0_146 = arith.constant 0 : index
    %200 = memref.load %arg2[%c4_145, %c0_146] : memref<7x3xf32, #tpu.memory_space<smem>>
    %201 = arith.mulf %199, %200 : f32
    %202 = math.absf %201 : f32
    %203 = arith.addf %198, %202 : f32
    %c4_147 = arith.constant 4 : index
    %c1_148 = arith.constant 1 : index
    %204 = memref.load %arg1[%c4_147, %c1_148] : memref<7x3xf32, #tpu.memory_space<smem>>
    %c4_149 = arith.constant 4 : index
    %c1_150 = arith.constant 1 : index
    %205 = memref.load %arg2[%c4_149, %c1_150] : memref<7x3xf32, #tpu.memory_space<smem>>
    %206 = arith.mulf %204, %205 : f32
    %207 = math.absf %206 : f32
    %208 = arith.addf %203, %207 : f32
    %c4_151 = arith.constant 4 : index
    %c2_152 = arith.constant 2 : index
    %209 = memref.load %arg1[%c4_151, %c2_152] : memref<7x3xf32, #tpu.memory_space<smem>>
    %c4_153 = arith.constant 4 : index
    %c2_154 = arith.constant 2 : index
    %210 = memref.load %arg2[%c4_153, %c2_154] : memref<7x3xf32, #tpu.memory_space<smem>>
    %211 = arith.mulf %209, %210 : f32
    %212 = math.absf %211 : f32
    %213 = arith.addf %208, %212 : f32
    %c5_155 = arith.constant 5 : index
    %c0_156 = arith.constant 0 : index
    %214 = memref.load %arg1[%c5_155, %c0_156] : memref<7x3xf32, #tpu.memory_space<smem>>
    %c5_157 = arith.constant 5 : index
    %c0_158 = arith.constant 0 : index
    %215 = memref.load %arg2[%c5_157, %c0_158] : memref<7x3xf32, #tpu.memory_space<smem>>
    %216 = arith.mulf %214, %215 : f32
    %217 = math.absf %216 : f32
    %218 = arith.addf %213, %217 : f32
    %c5_159 = arith.constant 5 : index
    %c1_160 = arith.constant 1 : index
    %219 = memref.load %arg1[%c5_159, %c1_160] : memref<7x3xf32, #tpu.memory_space<smem>>
    %c5_161 = arith.constant 5 : index
    %c1_162 = arith.constant 1 : index
    %220 = memref.load %arg2[%c5_161, %c1_162] : memref<7x3xf32, #tpu.memory_space<smem>>
    %221 = arith.mulf %219, %220 : f32
    %222 = math.absf %221 : f32
    %223 = arith.addf %218, %222 : f32
    %c5_163 = arith.constant 5 : index
    %c2_164 = arith.constant 2 : index
    %224 = memref.load %arg1[%c5_163, %c2_164] : memref<7x3xf32, #tpu.memory_space<smem>>
    %c5_165 = arith.constant 5 : index
    %c2_166 = arith.constant 2 : index
    %225 = memref.load %arg2[%c5_165, %c2_166] : memref<7x3xf32, #tpu.memory_space<smem>>
    %226 = arith.mulf %224, %225 : f32
    %227 = math.absf %226 : f32
    %228 = arith.addf %223, %227 : f32
    %c6_167 = arith.constant 6 : index
    %c0_168 = arith.constant 0 : index
    %229 = memref.load %arg1[%c6_167, %c0_168] : memref<7x3xf32, #tpu.memory_space<smem>>
    %c6_169 = arith.constant 6 : index
    %c0_170 = arith.constant 0 : index
    %230 = memref.load %arg2[%c6_169, %c0_170] : memref<7x3xf32, #tpu.memory_space<smem>>
    %231 = arith.mulf %229, %230 : f32
    %232 = math.absf %231 : f32
    %233 = arith.addf %228, %232 : f32
    %c6_171 = arith.constant 6 : index
    %c1_172 = arith.constant 1 : index
    %234 = memref.load %arg1[%c6_171, %c1_172] : memref<7x3xf32, #tpu.memory_space<smem>>
    %c6_173 = arith.constant 6 : index
    %c1_174 = arith.constant 1 : index
    %235 = memref.load %arg2[%c6_173, %c1_174] : memref<7x3xf32, #tpu.memory_space<smem>>
    %236 = arith.mulf %234, %235 : f32
    %237 = math.absf %236 : f32
    %238 = arith.addf %233, %237 : f32
    %c6_175 = arith.constant 6 : index
    %c2_176 = arith.constant 2 : index
    %239 = memref.load %arg1[%c6_175, %c2_176] : memref<7x3xf32, #tpu.memory_space<smem>>
    %c6_177 = arith.constant 6 : index
    %c2_178 = arith.constant 2 : index
    %240 = memref.load %arg2[%c6_177, %c2_178] : memref<7x3xf32, #tpu.memory_space<smem>>
    %241 = arith.mulf %239, %240 : f32
    %242 = math.absf %241 : f32
    %243 = arith.addf %238, %242 : f32
    %cst = arith.constant 0.0476190485 : f32
    %244 = arith.mulf %243, %cst : f32
    %245 = vector.broadcast %244 : f32 to vector<1x1x128xf32>
    %c0_179 = arith.constant 0 : index
    %c0_180 = arith.constant 0 : index
    %c0_181 = arith.constant 0 : index
    %246 = vector.load %arg5[%c0_179, %c0_180, %c0_181] : memref<1x1x128xf32, #tpu.memory_space<vmem>>, vector<1x1x128xf32>
    tpu.vector_store %arg5[%c0_179, %c0_180, %c0_181], %245 {strides = array<i32>} : memref<1x1x128xf32, #tpu.memory_space<vmem>>, vector<1x1x128xf32>,
    return
  }
  func.func @transform_0(%arg0: i32) -> (i32, i32) {
    %c0_i32 = arith.constant 0 : i32
    %c0_i32_0 = arith.constant 0 : i32
    %c0_i32_1 = arith.constant 0 : i32
    return %c0_i32, %c0_i32_0 : i32, i32
  }
  func.func @transform_1(%arg0: i32) -> (i32, i32) {
    %c0_i32 = arith.constant 0 : i32
    %c0_i32_0 = arith.constant 0 : i32
    %c0_i32_1 = arith.constant 0 : i32
    return %c0_i32, %c0_i32_0 : i32, i32
  }
  func.func @transform_2(%arg0: i32) -> (i32, i32, i32) {
    %c0_i32 = arith.constant 0 : i32
    %c0_i32_0 = arith.constant 0 : i32
    %c0_i32_1 = arith.constant 0 : i32
    return %c0_i32, %arg0, %c0_i32_0 : i32, i32, i32
  }
  func.func @transform_3(%arg0: i32) -> (i32, i32, i32) {
    %c0_i32 = arith.constant 0 : i32
    %c0_i32_0 = arith.constant 0 : i32
    %c0_i32_1 = arith.constant 0 : i32
    return %c0_i32, %arg0, %c0_i32_0 : i32, i32, i32
  }
  func.func @transform_4(%arg0: i32) -> (i32, i32, i32) {
    %c0_i32 = arith.constant 0 : i32
    %c0_i32_0 = arith.constant 0 : i32
    %c0_i32_1 = arith.constant 0 : i32
    return %arg0, %c0_i32, %c0_i32_0 : i32, i32, i32
  }
}

</mosaic_0001>

<llo_original>
// kernel: tpu_custom_call.1
$region0: #{tpu_custom_call.1}
  #allocation0 [shape = 'u32[]', space=smem, size = 0x4, offset = 0x4, fixed_abs, tag = 'smem constant byte address 0x4 - core index']
  #allocation1 [shape = 'u32[144,128]{1,0:T(1,128)}', space=vmem, size = 0x12000, scoped, tag = 'internal scratch']
  %s0 = inlined_call_operand.vmem [shape: f32[7,3], index: 0, kind: input, shape index: {}]
  %s1 = inlined_call_operand.vmem [shape: f32[7,3], index: 1, kind: input, shape index: {}]
  %s2 = inlined_call_operand.vmem [shape: f32[3,1,128], index: 2, kind: input, shape index: {}]
  %s3 = inlined_call_operand.hbm [shape: f32[3,1,128], index: 3, kind: output, shape index: {0}]
  %s4 = inlined_call_operand.hbm [shape: f32[1,1,128], index: 4, kind: output, shape index: {1}]
  %5 = xla_tuple %s3, %s4
  %s6 = sld [smem:[#allocation0]]
  $region38: #{tpu_custom_call.1} parent=0
    _
  %s8 = ssub.s32 1, %s6
  %s9 = scalar_select 0, %s8, %s6
  $region1: #{tpu_custom_call.1} parent=0
    #allocation2 [shape = 'u8[4096]{0}', space=smem, size = 0x1000, scoped, tag = 'input window, operand 0, single buffered']
    #allocation3 [shape = 's32[1]{0}', space=sflag, size = 0x4, scoped, tag = 'scoped memory for tpu_custom_call.1']
    #allocation4 [shape = 's32[1]{0}', space=sflag, size = 0x4, scoped, tag = 'scoped memory for tpu_custom_call.1']
    #allocation5 [shape = 'u8[4096]{0}', space=smem, size = 0x1000, scoped, tag = 'input window, operand 1, single buffered']
    #allocation6 [shape = 's32[1]{0}', space=sflag, size = 0x4, scoped, tag = 'scoped memory for tpu_custom_call.1']
    #allocation7 [shape = 'u8[1536]{0}', space=vmem, size = 0x800, scoped, tag = 'output window, operand 0, single buffered']
    #allocation8 [shape = 'u8[512]{0}', space=vmem, size = 0x400, scoped, tag = 'output window, operand 1, single buffered']
    #allocation9 [shape = 's32[1]{0}', space=sflag, size = 0x4, scoped, tag = 'scoped memory for tpu_custom_call.1']
    %10 = vsyncpa [#allocation4], 0
    %11 = vsyncpa [#allocation6], 0
    %12 = vsyncpa [#allocation3], 0
    %13 = vsyncpa [#allocation9], 0
    // Predicated region
    $region2: #{tpu_custom_call.1} parent=1 // pred_check
      _
    $region3: #{tpu_custom_call.1} parent=1 // pred_check_branch
      %15 = sbr.rel (0) target = $region5
    $region4: #{tpu_custom_call.1} parent=1 // pred_region
      %s17 = ssub.s32 128, 128
      %18 = vsyncadd [#allocation4], %s17
      %s20 = sshll.u32 %s0, 4
      %s21 = int_to_ptr.vmem [resolvable:$true] %s20
      %23 = dma.vmem_to_smem %s21, 128, [#allocation2], [#allocation4]
    $region5: #{tpu_custom_call.1} parent=1 // pred_fallthru
      _
    // Predicated region
    $region6: #{tpu_custom_call.1} parent=1 // pred_check
      _
    $region7: #{tpu_custom_call.1} parent=1 // pred_check_branch
      %25 = sbr.rel (0) target = $region9
    $region8: #{tpu_custom_call.1} parent=1 // pred_region
      %s27 = ssub.s32 128, 128
      %28 = vsyncadd [#allocation6], %s27
      %s30 = sshll.u32 %s1, 4
      %s31 = int_to_ptr.vmem [resolvable:$true] %s30
      %33 = dma.vmem_to_smem %s31, 128, [#allocation5], [#allocation6]
    $region9: #{tpu_custom_call.1} parent=1 // pred_fallthru
      _
    // Predicated region
    $region10: #{tpu_custom_call.1} parent=1 // pred_check
      _
    $region11: #{tpu_custom_call.1} parent=1 // pred_check_branch
      %35 = sbr.rel (0) target = $region13
    $region12: #{tpu_custom_call.1} parent=1 // pred_region
      _
    $region13: #{tpu_custom_call.1} parent=1 // pred_fallthru
      _
    // Predicated region
    $region14: #{tpu_custom_call.1} parent=1 // pred_check
      _
    $region15: #{tpu_custom_call.1} parent=1 // pred_check_branch
      %37 = sbr.rel (0) target = $region17
    $region16: #{tpu_custom_call.1} parent=1 // pred_region
      %38 = dma.done [#allocation4], 128
    $region17: #{tpu_custom_call.1} parent=1 // pred_fallthru
      _
    // Predicated region
    $region18: #{tpu_custom_call.1} parent=1 // pred_check
      _
    $region19: #{tpu_custom_call.1} parent=1 // pred_check_branch
      %40 = sbr.rel (0) target = $region21
    $region20: #{tpu_custom_call.1} parent=1 // pred_region
      %41 = dma.done [#allocation6], 128
    $region21: #{tpu_custom_call.1} parent=1 // pred_fallthru
      _
    %42 = sfence
    %v43 = vld [vmem:[%s2] sm:$0x1]
    %s44 = scalar_lea.vmem %s2, 1
    %v45 = vld [vmem:[%s44] sm:$0x1]
    %s46 = scalar_lea.vmem %s2, 2
    %v47 = vld [vmem:[%s46] sm:$0x1]
    %v48 = vmul.f32 %v47, %v47
    %v49 = vmul.f32 %v47, %v45
    %v50 = vmul.f32 %v47, %v43
    %v51 = vmul.f32 %v48, %v45
    %v52 = vmul.f32 %v48, %v43
    %s53 = sld [smem:[#allocation2]]
    %s54 = sld [smem:[#allocation5]]
    %s55 = smul.f32 %s53, %s54
    %s56 = sld [smem:[#allocation2 + $0x80]]
    %s57 = sld [smem:[#allocation5 + $0x80]]
    %s58 = smul.f32 %s56, %s57
    %s59 = sld [smem:[#allocation2 + $0x100]]
    %s60 = sld [smem:[#allocation5 + $0x100]]
    %s61 = smul.f32 %s59, %s60
    %s62 = sld [smem:[#allocation2 + $0x180]]
    %s63 = sld [smem:[#allocation5 + $0x180]]
    %s64 = smul.f32 %s62, %s63
    %s65 = sld [smem:[#allocation2 + $0x200]]
    %s66 = sld [smem:[#allocation5 + $0x200]]
    %s67 = smul.f32 %s65, %s66
    %s68 = sld [smem:[#allocation2 + $0x280]]
    %s69 = sld [smem:[#allocation5 + $0x280]]
    %s70 = smul.f32 %s68, %s69
    %s71 = sld [smem:[#allocation2 + $0x300]]
    %s72 = sld [smem:[#allocation5 + $0x300]]
    %s73 = smul.f32 %s71, %s72
    %v74 = vstv %s58
    %v75 = vmul.f32 %v74, %v47
    %v76 = vstv %s55
    %v77 = vadd.f32 %v76, %v75
    %v78 = vstv %s61
    %v79 = vmul.f32 %v78, %v48
    %v80 = vadd.f32 %v77, %v79
    %v81 = vstv %s64
    %v82 = vmul.f32 %v81, %v49
    %v83 = vadd.f32 %v80, %v82
    %v84 = vstv %s67
    %v85 = vmul.f32 %v84, %v50
    %v86 = vadd.f32 %v83, %v85
    %v87 = vstv %s70
    %v88 = vmul.f32 %v87, %v51
    %v89 = vadd.f32 %v86, %v88
    %v90 = vstv %s73
    %v91 = vmul.f32 %v90, %v52
    %v92 = vadd.f32 %v89, %v91
    %93 = vst [vmem:[#allocation7] sm:$0x1] %v92
    %s94 = sld [smem:[#allocation2 + $0x1]]
    %s95 = sld [smem:[#allocation5 + $0x1]]
    %s96 = smul.f32 %s94, %s95
    %s97 = sld [smem:[#allocation2 + $0x81]]
    %s98 = sld [smem:[#allocation5 + $0x81]]
    %s99 = smul.f32 %s97, %s98
    %s100 = sld [smem:[#allocation2 + $0x101]]
    %s101 = sld [smem:[#allocation5 + $0x101]]
    %s102 = smul.f32 %s100, %s101
    %s103 = sld [smem:[#allocation2 + $0x181]]
    %s104 = sld [smem:[#allocation5 + $0x181]]
    %s105 = smul.f32 %s103, %s104
    %s106 = sld [smem:[#allocation2 + $0x201]]
    %s107 = sld [smem:[#allocation5 + $0x201]]
    %s108 = smul.f32 %s106, %s107
    %s109 = sld [smem:[#allocation2 + $0x281]]
    %s110 = sld [smem:[#allocation5 + $0x281]]
    %s111 = smul.f32 %s109, %s110
    %s112 = sld [smem:[#allocation2 + $0x301]]
    %s113 = sld [smem:[#allocation5 + $0x301]]
    %s114 = smul.f32 %s112, %s113
    %v115 = vstv %s99
    %v116 = vmul.f32 %v115, %v47
    %v117 = vstv %s96
    %v118 = vadd.f32 %v117, %v116
    %v119 = vstv %s102
    %v120 = vmul.f32 %v119, %v48
    %v121 = vadd.f32 %v118, %v120
    %v122 = vstv %s105
    %v123 = vmul.f32 %v122, %v49
    %v124 = vadd.f32 %v121, %v123
    %v125 = vstv %s108
    %v126 = vmul.f32 %v125, %v50
    %v127 = vadd.f32 %v124, %v126
    %v128 = vstv %s111
    %v129 = vmul.f32 %v128, %v51
    %v130 = vadd.f32 %v127, %v129
    %v131 = vstv %s114
    %v132 = vmul.f32 %v131, %v52
    %v133 = vadd.f32 %v130, %v132
    %s134 = scalar_lea.vmem [#allocation7], 1
    %135 = vst [vmem:[%s134] sm:$0x1] %v133
    %s136 = sld [smem:[#allocation2 + $0x2]]
    %s137 = sld [smem:[#allocation5 + $0x2]]
    %s138 = smul.f32 %s136, %s137
    %s139 = sld [smem:[#allocation2 + $0x82]]
    %s140 = sld [smem:[#allocation5 + $0x82]]
    %s141 = smul.f32 %s139, %s140
    %s142 = sld [smem:[#allocation2 + $0x102]]
    %s143 = sld [smem:[#allocation5 + $0x102]]
    %s144 = smul.f32 %s142, %s143
    %s145 = sld [smem:[#allocation2 + $0x182]]
    %s146 = sld [smem:[#allocation5 + $0x182]]
    %s147 = smul.f32 %s145, %s146
    %s148 = sld [smem:[#allocation2 + $0x202]]
    %s149 = sld [smem:[#allocation5 + $0x202]]
    %s150 = smul.f32 %s148, %s149
    %s151 = sld [smem:[#allocation2 + $0x282]]
    %s152 = sld [smem:[#allocation5 + $0x282]]
    %s153 = smul.f32 %s151, %s152
    %s154 = sld [smem:[#allocation2 + $0x302]]
    %s155 = sld [smem:[#allocation5 + $0x302]]
    %s156 = smul.f32 %s154, %s155
    %v157 = vstv %s141
    %v158 = vmul.f32 %v157, %v47
    %v159 = vstv %s138
    %v160 = vadd.f32 %v159, %v158
    %v161 = vstv %s144
    %v162 = vmul.f32 %v161, %v48
    %v163 = vadd.f32 %v160, %v162
    %v164 = vstv %s147
    %v165 = vmul.f32 %v164, %v49
    %v166 = vadd.f32 %v163, %v165
    %v167 = vstv %s150
    %v168 = vmul.f32 %v167, %v50
    %v169 = vadd.f32 %v166, %v168
    %v170 = vstv %s153
    %v171 = vmul.f32 %v170, %v51
    %v172 = vadd.f32 %v169, %v171
    %v173 = vstv %s156
    %v174 = vmul.f32 %v173, %v52
    %v175 = vadd.f32 %v172, %v174
    %s176 = scalar_lea.vmem [#allocation7], 2
    %177 = vst [vmem:[%s176] sm:$0x1] %v175
    %s178 = sld [smem:[#allocation2]]
    %s179 = sld [smem:[#allocation5]]
    %s180 = smul.f32 %s178, %s179
    %s181 = sand.u32 2147483647, %s180
    %s182 = sld [smem:[#allocation2 + $0x1]]
    %s183 = sld [smem:[#allocation5 + $0x1]]
    %s184 = smul.f32 %s182, %s183
    %s185 = sand.u32 2147483647, %s184
    %s186 = sadd.f32 %s181, %s185
    %s187 = sld [smem:[#allocation2 + $0x2]]
    %s188 = sld [smem:[#allocation5 + $0x2]]
    %s189 = smul.f32 %s187, %s188
    %s190 = sand.u32 2147483647, %s189
    %s191 = sadd.f32 %s186, %s190
    %s192 = sld [smem:[#allocation2 + $0x80]]
    %s193 = sld [smem:[#allocation5 + $0x80]]
    %s194 = smul.f32 %s192, %s193
    %s195 = sand.u32 2147483647, %s194
    %s196 = sadd.f32 %s191, %s195
    %s197 = sld [smem:[#allocation2 + $0x81]]
    %s198 = sld [smem:[#allocation5 + $0x81]]
    %s199 = smul.f32 %s197, %s198
    %s200 = sand.u32 2147483647, %s199
    %s201 = sadd.f32 %s196, %s200
    %s202 = sld [smem:[#allocation2 + $0x82]]
    %s203 = sld [smem:[#allocation5 + $0x82]]
    %s204 = smul.f32 %s202, %s203
    %s205 = sand.u32 2147483647, %s204
    %s206 = sadd.f32 %s201, %s205
    %s207 = sld [smem:[#allocation2 + $0x100]]
    %s208 = sld [smem:[#allocation5 + $0x100]]
    %s209 = smul.f32 %s207, %s208
    %s210 = sand.u32 2147483647, %s209
    %s211 = sadd.f32 %s206, %s210
    %s212 = sld [smem:[#allocation2 + $0x101]]
    %s213 = sld [smem:[#allocation5 + $0x101]]
    %s214 = smul.f32 %s212, %s213
    %s215 = sand.u32 2147483647, %s214
    %s216 = sadd.f32 %s211, %s215
    %s217 = sld [smem:[#allocation2 + $0x102]]
    %s218 = sld [smem:[#allocation5 + $0x102]]
    %s219 = smul.f32 %s217, %s218
    %s220 = sand.u32 2147483647, %s219
    %s221 = sadd.f32 %s216, %s220
    %s222 = sld [smem:[#allocation2 + $0x180]]
    %s223 = sld [smem:[#allocation5 + $0x180]]
    %s224 = smul.f32 %s222, %s223
    %s225 = sand.u32 2147483647, %s224
    %s226 = sadd.f32 %s221, %s225
    %s227 = sld [smem:[#allocation2 + $0x181]]
    %s228 = sld [smem:[#allocation5 + $0x181]]
    %s229 = smul.f32 %s227, %s228
    %s230 = sand.u32 2147483647, %s229
    %s231 = sadd.f32 %s226, %s230
    %s232 = sld [smem:[#allocation2 + $0x182]]
    %s233 = sld [smem:[#allocation5 + $0x182]]
    %s234 = smul.f32 %s232, %s233
    %s235 = sand.u32 2147483647, %s234
    %s236 = sadd.f32 %s231, %s235
    %s237 = sld [smem:[#allocation2 + $0x200]]
    %s238 = sld [smem:[#allocation5 + $0x200]]
    %s239 = smul.f32 %s237, %s238
    %s240 = sand.u32 2147483647, %s239
    %s241 = sadd.f32 %s236, %s240
    %s242 = sld [smem:[#allocation2 + $0x201]]
    %s243 = sld [smem:[#allocation5 + $0x201]]
    %s244 = smul.f32 %s242, %s243
    %s245 = sand.u32 2147483647, %s244
    %s246 = sadd.f32 %s241, %s245
    %s247 = sld [smem:[#allocation2 + $0x202]]
    %s248 = sld [smem:[#allocation5 + $0x202]]
    %s249 = smul.f32 %s247, %s248
    %s250 = sand.u32 2147483647, %s249
    %s251 = sadd.f32 %s246, %s250
    %s252 = sld [smem:[#allocation2 + $0x280]]
    %s253 = sld [smem:[#allocation5 + $0x280]]
    %s254 = smul.f32 %s252, %s253
    %s255 = sand.u32 2147483647, %s254
    %s256 = sadd.f32 %s251, %s255
    %s257 = sld [smem:[#allocation2 + $0x281]]
    %s258 = sld [smem:[#allocation5 + $0x281]]
    %s259 = smul.f32 %s257, %s258
    %s260 = sand.u32 2147483647, %s259
    %s261 = sadd.f32 %s256, %s260
    %s262 = sld [smem:[#allocation2 + $0x282]]
    %s263 = sld [smem:[#allocation5 + $0x282]]
    %s264 = smul.f32 %s262, %s263
    %s265 = sand.u32 2147483647, %s264
    %s266 = sadd.f32 %s261, %s265
    %s267 = sld [smem:[#allocation2 + $0x300]]
    %s268 = sld [smem:[#allocation5 + $0x300]]
    %s269 = smul.f32 %s267, %s268
    %s270 = sand.u32 2147483647, %s269
    %s271 = sadd.f32 %s266, %s270
    %s272 = sld [smem:[#allocation2 + $0x301]]
    %s273 = sld [smem:[#allocation5 + $0x301]]
    %s274 = smul.f32 %s272, %s273
    %s275 = sand.u32 2147483647, %s274
    %s276 = sadd.f32 %s271, %s275
    %s277 = sld [smem:[#allocation2 + $0x302]]
    %s278 = sld [smem:[#allocation5 + $0x302]]
    %s279 = smul.f32 %s277, %s278
    %s280 = sand.u32 2147483647, %s279
    %s281 = sadd.f32 %s276, %s280
    %s282 = smul.f32 %s281, 0.04761905
    %v283 = vstv %s282
    %284 = vst [vmem:[#allocation8] sm:$0x1] %v283
    // Predicated region
    $region22: #{tpu_custom_call.1} parent=1 // pred_check
      _
    $region23: #{tpu_custom_call.1} parent=1 // pred_check_branch
      %286 = sbr.rel (0) target = $region25
    $region24: #{tpu_custom_call.1} parent=1 // pred_region
      %s288 = ssub.s32 48, 48
      %289 = vsyncadd [#allocation3], %s288
      %s290 = sshll.u32 [#allocation7], 4
      %s291 = int_to_ptr.vmem [resolvable:$true] %s290
      %296 = dma.vmem_to_hbm [thread:$0]  %s291, 48, %s3, [#allocation3], 16, 16, 1
    $region25: #{tpu_custom_call.1} parent=1 // pred_fallthru
      _
    // Predicated region
    $region26: #{tpu_custom_call.1} parent=1 // pred_check
      _
    $region27: #{tpu_custom_call.1} parent=1 // pred_check_branch
      %298 = sbr.rel (0) target = $region29
    $region28: #{tpu_custom_call.1} parent=1 // pred_region
      %s300 = ssub.s32 16, 16
      %301 = vsyncadd [#allocation9], %s300
      %s303 = sshll.u32 [#allocation8], 4
      %s304 = int_to_ptr.vmem [resolvable:$true] %s303
      %306 = dma.vmem_to_hbm [thread:$0]  %s304, 16, %s4, [#allocation9]
    $region29: #{tpu_custom_call.1} parent=1 // pred_fallthru
      _
    // Predicated region
    $region30: #{tpu_custom_call.1} parent=1 // pred_check
      _
    $region31: #{tpu_custom_call.1} parent=1 // pred_check_branch
      %308 = sbr.rel (0) target = $region33
    $region32: #{tpu_custom_call.1} parent=1 // pred_region
      %309 = dma.done [#allocation3], 48
    $region33: #{tpu_custom_call.1} parent=1 // pred_fallthru
      _
    // Predicated region
    $region34: #{tpu_custom_call.1} parent=1 // pred_check
      _
    $region35: #{tpu_custom_call.1} parent=1 // pred_check_branch
      %311 = sbr.rel (0) target = $region37
    $region36: #{tpu_custom_call.1} parent=1 // pred_region
      %312 = dma.done [#allocation9], 16
    $region37: #{tpu_custom_call.1} parent=1 // pred_fallthru
      _
    %313 = vsyncpa [#allocation3], 1
    %314 = vsyncpa [#allocation9], 1
    %315 = vsyncpa [#allocation4], 1
    %316 = vsyncpa [#allocation6], 1

</llo_original>
